<compile_context>
chip_gen: v7x
topology: tpu7x:2x2x1
jax: 0.10.0
libtpu: 0.0.40
codegen_flags: <defaults>
</compile_context>

<pallas_src>
import functools

import jax
import jax.numpy as jnp
import numpy as np
from jax.experimental import pallas as pl
from jax.experimental.pallas import tpu as pltpu


def _round_up(x, m):
    return (x + m - 1) // m * m


_TM = 256  # batch tile for the large-batch path (full MXU rows on v6e/v7x)


# ----------------------------------------------------------------------------
# Fused kernel: (folded fc+ct1)+ReLU -> (folded ct2)+sigmoid.
# All intermediates live in vregs/VMEM; only z and the final slab touch HBM.
# ----------------------------------------------------------------------------
def _fused_decoder_kernel(z_ref, w01_ref, b01_ref, w2_ref, b2_ref, o_ref):
    # folded fc + conv_trans1: (M, L) @ (L, 392) + b01, ReLU
    h = jnp.dot(z_ref[...], w01_ref[...],
                preferred_element_type=jnp.float32) + b01_ref[...]
    h = jnp.maximum(h, 0.0)
    # folded conv_trans2: (M, 392) @ (392, 256) + b2
    h = jnp.dot(h, w2_ref[...],
                preferred_element_type=jnp.float32) + b2_ref[...]
    # numerically stable sigmoid (no inf intermediates, exact in f32)
    e = jnp.exp(-jnp.abs(h))
    sig = jnp.where(h >= 0.0, 1.0 / (1.0 + e), e / (1.0 + e))
    o_ref[...] = sig.astype(o_ref.dtype)


def _fused_decoder_call(z_p, w01, b01, w2, b2):
    Mp, L = z_p.shape
    D2 = w01.shape[1]          # 392 (unpadded, full-array dim -> legal block)
    D3p = w2.shape[1]          # 256 (lane-padded output)

    if Mp <= _TM:
        # Single invocation, no grid, no software pipeline: every operand is a
        # full-array VMEM block.
        vmem = pl.BlockSpec(memory_space=pltpu.MemorySpace.VMEM)
        return pl.pallas_call(
            _fused_decoder_kernel,
            out_shape=jax.ShapeDtypeStruct((Mp, D3p), jnp.float32),
            in_specs=[vmem, vmem, vmem, vmem, vmem],
            out_specs=vmem,
        )(z_p, w01, b01, w2, b2)

    # Large-batch path: tile the batch dim; weights/biases use constant
    # index_maps so they are DMA'd once and stay resident across the M loop.
    Mt = _round_up(Mp, _TM)
    if Mt != Mp:
        z_p = jnp.pad(z_p, ((0, Mt - Mp), (0, 0)))
    out = pl.pallas_call(
        _fused_decoder_kernel,
        out_shape=jax.ShapeDtypeStruct((Mt, D3p), jnp.float32),
        grid=(Mt // _TM,),
        in_specs=[
            pl.BlockSpec((_TM, L), lambda i: (i, 0)),
            pl.BlockSpec((L, D2), lambda i: (0, 0)),
            pl.BlockSpec((1, D2), lambda i: (0, 0)),
            pl.BlockSpec((D2, D3p), lambda i: (0, 0)),
            pl.BlockSpec((1, D3p), lambda i: (0, 0)),
        ],
        out_specs=pl.BlockSpec((_TM, D3p), lambda i: (i, 0)),
        compiler_params=pltpu.CompilerParams(
            dimension_semantics=("parallel",)),
    )(z_p, w01, b01, w2, b2)
    return out[:Mp]


# ----------------------------------------------------------------------------
# One-time parameter folding (outside the per-call hot path).
# ConvTranspose2d is linear, so its dense matrix is obtained by pushing an
# identity batch of one-hot (c,h,w) inputs through the equivalent dilated conv.
# The fc layer (no activation before ct1) is then folded into the ct1 matrix.
# ----------------------------------------------------------------------------
def fold_decoder_params(params):
    f32 = jnp.float32

    def conv_t_matrix(w_t, bias, stride, padding, in_chw):
        Cin, Cout, K, _ = w_t.shape
        C, H, W = in_chw
        assert C == Cin
        n = Cin * H * W
        eye = jnp.eye(n, dtype=f32).reshape(n, Cin, H, W)
        x = jnp.transpose(eye, (0, 2, 3, 1))                        # NHWC
        rhs = jnp.transpose(w_t[:, :, ::-1, ::-1], (2, 3, 0, 1))    # HWIO
        pad = K - 1 - padding
        y = jax.lax.conv_general_dilated(
            x, rhs.astype(f32), window_strides=(1, 1),
            padding=((pad, pad), (pad, pad)),
            lhs_dilation=(stride, stride),
            dimension_numbers=("NHWC", "HWIO", "NHWC"))
        y = jnp.transpose(y, (0, 3, 1, 2))                          # (n,Cout,Ho,Wo)
        Ho, Wo = int(y.shape[2]), int(y.shape[3])
        mat = y.reshape(n, Cout * Ho * Wo)                          # NCHW-flat cols
        b_full = jnp.repeat(bias.astype(f32), Ho * Wo)              # channel-major
        return mat, b_full, (Cout, Ho, Wo)

    # fc (PyTorch Linear: z @ W.T + b)
    w0 = params["fc_w"].T.astype(f32)                               # (L, 256)
    b0 = params["fc_b"].astype(f32)                                 # (256,)

    w1, b1, shp1 = conv_t_matrix(params["ct1_w"], params["ct1_b"], 2, 1,
                                 (16, 4, 4))                        # (256, 392)
    w2, b2, shp2 = conv_t_matrix(params["ct2_w"], params["ct2_b"], 2, 1,
                                 shp1)                              # (392, 196)

    # Fold fc into ct1 (both linear, no activation in between).
    w01 = w0 @ w1                                                   # (L, 392)
    b01 = b0 @ w1 + b1                                              # (392,)

    # Lane-pad only the OUTPUT dim (196 -> 256) so the final store is dense;
    # padded columns are exactly 0 + 0 and get sliced off after the kernel.
    D3 = w2.shape[1]
    D3p = _round_up(D3, 128)
    w2p = jnp.pad(w2, ((0, 0), (0, D3p - D3)))
    b2p = jnp.pad(b2, (0, D3p - D3))

    return {
        "w01": w01, "b01": b01.reshape(1, -1),
        "w2": w2p, "b2": b2p.reshape(1, -1),
        "out_chw": shp2,        # (1, 14, 14)
        "out_dim": D3,          # 196
    }


# ----------------------------------------------------------------------------
# Decoder forward (matches the PyTorch module: z:(B,L) -> out:(B,1,14,14)).
# ----------------------------------------------------------------------------
@functools.partial(jax.jit, static_argnums=(5, 6))
def _decoder_jit(z, w01, b01, w2, b2, out_chw, out_dim):
    B = z.shape[0]
    Mp = _round_up(B, 8)                            # sublane-align batch
    z_p = jnp.pad(z.astype(jnp.float32), ((0, Mp - B), (0, 0)))
    flat = _fused_decoder_call(z_p, w01, b01, w2, b2)
    flat = flat[:B, :out_dim]                       # drop pad rows / lanes
    Cout, Ho, Wo = out_chw
    return flat.reshape(B, Cout, Ho, Wo)            # NCHW (Cout=1: pure reshape)


def decoder_forward(z, folded):
    return _decoder_jit(z, folded["w01"], folded["b01"], folded["w2"],
                        folded["b2"], folded["out_chw"], folded["out_dim"])


# ----------------------------------------------------------------------------
# Pure-JAX reference (unfused, uses lax.conv_general_dilated with lhs_dilation).
# ----------------------------------------------------------------------------
def reference_forward(z, params):
    B = z.shape[0]
    h = z @ params["fc_w"].T + params["fc_b"]
    x = jnp.transpose(h.reshape(B, 16, 4, 4), (0, 2, 3, 1))  # NHWC

    def ct(x, w_t, b, stride, padding):
        K = w_t.shape[-1]
        rhs = jnp.transpose(w_t[:, :, ::-1, ::-1], (2, 3, 0, 1))  # HWIO
        pad = K - 1 - padding
        y = jax.lax.conv_general_dilated(
            x, rhs, window_strides=(1, 1),
            padding=((pad, pad), (pad, pad)),
            lhs_dilation=(stride, stride),
            dimension_numbers=("NHWC", "HWIO", "NHWC"))
        return y + b

    x = jax.nn.relu(ct(x, params["ct1_w"], params["ct1_b"], 2, 1))
    x = jax.nn.sigmoid(ct(x, params["ct2_w"], params["ct2_b"], 2, 1))
    return jnp.transpose(x, (0, 3, 1, 2))


if __name__ == "__main__":
    latent_dim = 8
    B = 2

    key = jax.random.PRNGKey(0)
    k = jax.random.split(key, 7)
    # Deterministic synthetic parameters with PyTorch module shapes.
    params = {
        "fc_w": 0.1 * jax.random.normal(k[0], (16 * 4 * 4, latent_dim), jnp.float32),
        "fc_b": 0.1 * jax.random.normal(k[1], (16 * 4 * 4,), jnp.float32),
        "ct1_w": 0.1 * jax.random.normal(k[2], (16, 8, 3, 3), jnp.float32),
        "ct1_b": 0.1 * jax.random.normal(k[3], (8,), jnp.float32),
        "ct2_w": 0.1 * jax.random.normal(k[4], (8, 1, 4, 4), jnp.float32),
        "ct2_b": 0.1 * jax.random.normal(k[5], (1,), jnp.float32),
    }
    z = jax.random.normal(k[6], (B, latent_dim), jnp.float32)

    folded = fold_decoder_params(params)

    # Small batch (no-grid path).
    out = jax.block_until_ready(decoder_forward(z, folded))
    assert out.shape == (B, 1, 14, 14), out.shape
    ref = jax.block_until_ready(reference_forward(z, params))
    assert np.allclose(np.asarray(out), np.asarray(ref), atol=1e-4), \
        "Pallas decoder mismatch vs JAX reference (small batch)"

    # Larger batch exercises the batch-tiled ('parallel' M axis) path.
    z_big = jax.random.normal(jax.random.PRNGKey(1), (300, latent_dim), jnp.float32)
    out_big = jax.block_until_ready(decoder_forward(z_big, folded))
    ref_big = jax.block_until_ready(reference_forward(z_big, params))
    assert out_big.shape == (300, 1, 14, 14), out_big.shape
    assert np.allclose(np.asarray(out_big), np.asarray(ref_big), atol=1e-4), \
        "Pallas decoder mismatch vs JAX reference (tiled batch)"

    print("KERNEL_OK")
</pallas_src>

<mosaic_0001>
module attributes {stable_mosaic.version = 11 : i64} {
  func.func @_fused_decoder_kernel(%arg0: memref<8x8xf32, #tpu.memory_space<vmem>>, %arg1: memref<8x392xf32, #tpu.memory_space<vmem>>, %arg2: memref<1x392xf32, #tpu.memory_space<vmem>>, %arg3: memref<392x256xf32, #tpu.memory_space<vmem>>, %arg4: memref<1x256xf32, #tpu.memory_space<vmem>>, %arg5: memref<8x256xf32, #tpu.memory_space<vmem>>) attributes {dimension_semantics = [], scalar_prefetch = 0 : i64, scratch_operands = 0 : i64, tpu.core_type = #tpu.core_type<tc>} {
    %c0 = arith.constant 0 : index
    %c0_0 = arith.constant 0 : index
    %0 = vector.load %arg0[%c0, %c0_0] : memref<8x8xf32, #tpu.memory_space<vmem>>, vector<8x8xf32>
    %c0_1 = arith.constant 0 : index
    %c0_2 = arith.constant 0 : index
    %1 = vector.load %arg1[%c0_1, %c0_2] : memref<8x392xf32, #tpu.memory_space<vmem>>, vector<8x392xf32>
    %cst = arith.constant dense<0.000000e+00> : vector<8x392xf32>
    %2 = tpu.matmul %0, %1, %cst {dimension_numbers = #tpu.dot_dimension_numbers<[1], [0], [0], [1], [0, 0, 1, 1], [], []>} : vector<8x8xf32>, vector<8x392xf32>, vector<8x392xf32> -> vector<8x392xf32>
    %c0_3 = arith.constant 0 : index
    %c0_4 = arith.constant 0 : index
    %3 = vector.load %arg2[%c0_3, %c0_4] : memref<1x392xf32, #tpu.memory_space<vmem>>, vector<1x392xf32>
    %4 = vector.broadcast %3 : vector<1x392xf32> to vector<8x392xf32>
    %5 = arith.addf %2, %4 : vector<8x392xf32>
    %cst_5 = arith.constant 0.000000e+00 : f32
    %6 = vector.broadcast %cst_5 : f32 to vector<8x392xf32>
    %7 = arith.maximumf %5, %6 : vector<8x392xf32>
    %c0_6 = arith.constant 0 : index
    %c0_7 = arith.constant 0 : index
    %8 = vector.load %arg3[%c0_6, %c0_7] : memref<392x256xf32, #tpu.memory_space<vmem>>, vector<392x256xf32>
    %cst_8 = arith.constant dense<0.000000e+00> : vector<8x256xf32>
    %9 = tpu.matmul %7, %8, %cst_8 {dimension_numbers = #tpu.dot_dimension_numbers<[1], [0], [0], [1], [0, 0, 1, 1], [], []>} : vector<8x392xf32>, vector<392x256xf32>, vector<8x256xf32> -> vector<8x256xf32>
    %c0_9 = arith.constant 0 : index
    %c0_10 = arith.constant 0 : index
    %10 = vector.load %arg4[%c0_9, %c0_10] : memref<1x256xf32, #tpu.memory_space<vmem>>, vector<1x256xf32>
    %11 = vector.broadcast %10 : vector<1x256xf32> to vector<8x256xf32>
    %12 = arith.addf %9, %11 : vector<8x256xf32>
    %13 = math.absf %12 : vector<8x256xf32>
    %cst_11 = arith.constant 0.000000e+00 : f32
    %14 = vector.broadcast %cst_11 : f32 to vector<8x256xf32>
    %15 = arith.subf %14, %13 : vector<8x256xf32>
    %16 = math.exp %15 : vector<8x256xf32>
    %cst_12 = arith.constant 0.000000e+00 : f32
    %17 = vector.broadcast %cst_12 : f32 to vector<8x256xf32>
    %18 = arith.cmpf oge, %12, %17 : vector<8x256xf32>
    %cst_13 = arith.constant 1.000000e+00 : f32
    %19 = vector.broadcast %cst_13 : f32 to vector<8x256xf32>
    %20 = arith.addf %19, %16 : vector<8x256xf32>
    %cst_14 = arith.constant 1.000000e+00 : f32
    %21 = vector.broadcast %cst_14 : f32 to vector<8x256xf32>
    %22 = arith.divf %21, %20 : vector<8x256xf32>
    %cst_15 = arith.constant 1.000000e+00 : f32
    %23 = vector.broadcast %cst_15 : f32 to vector<8x256xf32>
    %24 = arith.addf %23, %16 : vector<8x256xf32>
    %25 = arith.divf %16, %24 : vector<8x256xf32>
    %26 = arith.select %18, %22, %25 : vector<8x256xi1>, vector<8x256xf32>
    %c0_16 = arith.constant 0 : index
    %c0_17 = arith.constant 0 : index
    %27 = vector.load %arg5[%c0_16, %c0_17] : memref<8x256xf32, #tpu.memory_space<vmem>>, vector<8x256xf32>
    tpu.vector_store %arg5[%c0_16, %c0_17], %26 {strides = array<i32>} : memref<8x256xf32, #tpu.memory_space<vmem>>, vector<8x256xf32>,
    return
  }
}

</mosaic_0001>

<llo_original>
// kernel: _decoder_jit.1
$region0: #{_decoder_jit.1}
  #allocation0 [shape = 'u32[]', space=smem, size = 0x4, offset = 0x4, fixed_abs, tag = 'smem constant byte address 0x4 - core index']
  #allocation1 [shape = 'u32[144,128]{1,0:T(1,128)}', space=vmem, size = 0x12000, scoped, tag = 'internal scratch']
  %s0 = inlined_call_operand.vmem [shape: f32[8,8], index: 0, kind: input, shape index: {}]
  %s1 = inlined_call_operand.hbm [shape: f32[8,392], index: 1, kind: input, shape index: {}]
  %s2 = inlined_call_operand.vmem [shape: f32[1,392], index: 2, kind: input, shape index: {}]
  %s3 = inlined_call_operand.hbm [shape: f32[392,256], index: 3, kind: input, shape index: {}]
  %s4 = inlined_call_operand.vmem [shape: f32[1,256], index: 4, kind: input, shape index: {}]
  %s5 = inlined_call_operand.vmem [shape: f32[8,256], index: 5, kind: output, shape index: {}]
  %s6 = sld [smem:[#allocation0]]
  $region38: #{_decoder_jit.1} parent=0
    _
  %s8 = ssub.s32 1, %s6
  %s9 = scalar_select 0, %s8, %s6
  $region1: #{_decoder_jit.1} parent=0
    #allocation2 [shape = 'u8[16384]{0}', space=vmem, size = 0x4000, scoped, tag = 'input window, operand 1, single buffered']
    #allocation3 [shape = 's32[1]{0}', space=sflag, size = 0x4, scoped, tag = 'scoped memory for _decoder_jit.1']
    #allocation4 [shape = 'u8[401408]{0}', space=vmem, size = 0x62000, scoped, tag = 'input window, operand 3, single buffered']
    #allocation5 [shape = 's32[1]{0}', space=sflag, size = 0x4, scoped, tag = 'scoped memory for _decoder_jit.1']
    %10 = vsyncpa [#allocation3], 0
    %11 = vsyncpa [#allocation5], 0
    // Predicated region
    $region2: #{_decoder_jit.1} parent=1 // pred_check
      _
    $region3: #{_decoder_jit.1} parent=1 // pred_check_branch
      %13 = sbr.rel (0) target = $region5
    $region4: #{_decoder_jit.1} parent=1 // pred_region
      _
    $region5: #{_decoder_jit.1} parent=1 // pred_fallthru
      _
    // Predicated region
    $region6: #{_decoder_jit.1} parent=1 // pred_check
      _
    $region7: #{_decoder_jit.1} parent=1 // pred_check_branch
      %15 = sbr.rel (0) target = $region9
    $region8: #{_decoder_jit.1} parent=1 // pred_region
      %s17 = ssub.s32 512, 512
      %18 = vsyncadd [#allocation3], %s17
      %s20 = sshll.u32 [#allocation2], 4
      %s21 = int_to_ptr.vmem [resolvable:$true] %s20
      %23 = dma.hbm_to_vmem [thread:$0]  %s1, 512, %s21, [#allocation3]
    $region9: #{_decoder_jit.1} parent=1 // pred_fallthru
      _
    // Predicated region
    $region10: #{_decoder_jit.1} parent=1 // pred_check
      _
    $region11: #{_decoder_jit.1} parent=1 // pred_check_branch
      %25 = sbr.rel (0) target = $region13
    $region12: #{_decoder_jit.1} parent=1 // pred_region
      _
    $region13: #{_decoder_jit.1} parent=1 // pred_fallthru
      _
    // Predicated region
    $region14: #{_decoder_jit.1} parent=1 // pred_check
      _
    $region15: #{_decoder_jit.1} parent=1 // pred_check_branch
      %27 = sbr.rel (0) target = $region17
    $region16: #{_decoder_jit.1} parent=1 // pred_region
      %s29 = ssub.s32 12544, 12544
      %30 = vsyncadd [#allocation5], %s29
      %s31 = sshll.u32 [#allocation4], 4
      %s32 = int_to_ptr.vmem [resolvable:$true] %s31
      %37 = dma.hbm_to_vmem [thread:$0]  %s3, 12544, %s32, [#allocation5], 256, 256, 16
    $region17: #{_decoder_jit.1} parent=1 // pred_fallthru
      _
    // Predicated region
    $region18: #{_decoder_jit.1} parent=1 // pred_check
      _
    $region19: #{_decoder_jit.1} parent=1 // pred_check_branch
      %39 = sbr.rel (0) target = $region21
    $region20: #{_decoder_jit.1} parent=1 // pred_region
      _
    $region21: #{_decoder_jit.1} parent=1 // pred_fallthru
      _
    // Predicated region
    $region22: #{_decoder_jit.1} parent=1 // pred_check
      _
    $region23: #{_decoder_jit.1} parent=1 // pred_check_branch
      %41 = sbr.rel (0) target = $region25
    $region24: #{_decoder_jit.1} parent=1 // pred_region
      %42 = dma.done [#allocation3], 512
    $region25: #{_decoder_jit.1} parent=1 // pred_fallthru
      _
    // Predicated region
    $region26: #{_decoder_jit.1} parent=1 // pred_check
      _
    $region27: #{_decoder_jit.1} parent=1 // pred_check_branch
      %44 = sbr.rel (0) target = $region29
    $region28: #{_decoder_jit.1} parent=1 // pred_region
      %45 = dma.done [#allocation5], 12544
    $region29: #{_decoder_jit.1} parent=1 // pred_fallthru
      _
    %v46 = vld [vmem:[%s0] sm:$0xff]
    %v47 = vld [vmem:[#allocation2] sm:$0xff]
    %v48 = vld [vmem:[#allocation2 + $0x8] sm:$0xff]
    %v49 = vld [vmem:[#allocation2 + $0x10] sm:$0xff]
    %v50 = vld [vmem:[#allocation2 + $0x18] sm:$0xff]
    %v51 = vld [vmem:[%s2] sm:$0xf]
    %v53 = vlaneseq
    %v54 = vshrl.u32 %v53, 7
    %v55 = vsub.s32 0, %v54
    %v56 = vrot.slane %v51, %v55
    %v57 = vlaneseq
    %v58 = vshrl.u32 %v57, 7
    %v59 = vsub.s32 1, %v58
    %v60 = vrot.slane %v51, %v59
    %v61 = vlaneseq
    %v62 = vshrl.u32 %v61, 7
    %v63 = vsub.s32 2, %v62
    %v64 = vrot.slane %v51, %v63
    %v65 = vlaneseq
    %v66 = vshrl.u32 %v65, 7
    %v67 = vsub.s32 3, %v66
    %v68 = vrot.slane %v51, %v67
    %vm73 = vcmask 64512
    %v75 = vsel %vm73, %v46, 0
    %77 = vmatprep.subr.mxu0 %v48
    %78 = vmatpush1.msra.mxu0 %v47
    %79 = vmatprep.subr.mxu0 0.0
    %80 = vmatpush1.msra.mxu0 0.0
    %81 = vmatprep.subr.mxu0 0.0
    %82 = vmatpush1.msra.mxu0 0.0
    %83 = vmatprep.subr.mxu0 0.0
    %84 = vmatpush1.msra.mxu0 0.0
    %85 = vmatprep.subr.mxu0 0.0
    %86 = vmatpush1.msra.mxu0 0.0
    %87 = vmatprep.subr.mxu0 0.0
    %88 = vmatpush1.msra.mxu0 0.0
    %89 = vmatprep.subr.mxu0 0.0
    %90 = vmatpush1.msra.mxu0 0.0
    %91 = vmatprep.subr.mxu0 0.0
    %92 = vmatpush1.msra.mxu0 0.0
    %93 = vmatprep.subr.mxu0 0.0
    %94 = vmatpush1.msra.mxu0 0.0
    %95 = vmatprep.subr.mxu0 0.0
    %96 = vmatpush1.msra.mxu0 0.0
    %97 = vmatprep.subr.mxu0 0.0
    %98 = vmatpush1.msra.mxu0 0.0
    %99 = vmatprep.subr.mxu0 0.0
    %100 = vmatpush1.msra.mxu0 0.0
    %101 = vmatprep.subr.mxu0 0.0
    %102 = vmatpush1.msra.mxu0 0.0
    %103 = vmatprep.subr.mxu0 0.0
    %104 = vmatpush1.msra.mxu0 0.0
    %105 = vmatprep.subr.mxu0 0.0
    %106 = vmatpush1.msra.mxu0 0.0
    %107 = vmatprep.subr.mxu0 0.0
    %108 = vmatpush1.msra.mxu0 0.0
    %109 = vmatprep.subr.mxu0 0.0
    %110 = vmatpush1.msra.mxu0 0.0
    %111 = vmatprep.subr.mxu0 0.0
    %112 = vmatpush1.msra.mxu0 0.0
    %113 = vmatprep.subr.mxu0 0.0
    %114 = vmatpush1.msra.mxu0 0.0
    %115 = vmatprep.subr.mxu0 0.0
    %116 = vmatpush1.msra.mxu0 0.0
    %117 = vmatprep.subr.mxu0 0.0
    %118 = vmatpush1.msra.mxu0 0.0
    %119 = vmatprep.subr.mxu0 0.0
    %120 = vmatpush1.msra.mxu0 0.0
    %121 = vmatprep.subr.mxu0 0.0
    %122 = vmatpush1.msra.mxu0 0.0
    %123 = vmatprep.subr.mxu0 0.0
    %124 = vmatpush1.msra.mxu0 0.0
    %125 = vmatprep.subr.mxu0 0.0
    %126 = vmatpush1.msra.mxu0 0.0
    %127 = vmatprep.subr.mxu0 0.0
    %128 = vmatpush1.msra.mxu0 0.0
    %129 = vmatprep.subr.mxu0 0.0
    %130 = vmatpush1.msra.mxu0 0.0
    %131 = vmatprep.subr.mxu0 0.0
    %132 = vmatpush1.msra.mxu0 0.0
    %133 = vmatprep.subr.mxu0 0.0
    %134 = vmatpush1.msra.mxu0 0.0
    %135 = vmatprep.subr.mxu0 0.0
    %136 = vmatpush1.msra.mxu0 0.0
    %137 = vmatprep.subr.mxu0 0.0
    %138 = vmatpush1.msra.mxu0 0.0
    %139 = vmatprep.subr.mxu0 0.0
    %140 = vmatpush1.msra.mxu0 0.0
    %141 = vmatprep.mubr.f32.mxu0 0.0
    %142 = vmatmul.mubr.f32.gmra.mrb[0].mxu0 %v75
    %v143 = vpop.f32.mrb[0].mxu0
    %v144 = vadd.f32 %v56, %v143
    %v145 = vpop.f32.mrb[0].mxu0
    %v146 = vadd.f32 %v60, %v145
    %147 = vdwg.mxu0
    %148 = vmatprep.subr.mxu0 %v50
    %149 = vmatpush1.msra.mxu0 %v49
    %150 = vmatprep.subr.mxu0 0.0
    %151 = vmatpush1.msra.mxu0 0.0
    %152 = vmatprep.subr.mxu0 0.0
    %153 = vmatpush1.msra.mxu0 0.0
    %154 = vmatprep.subr.mxu0 0.0
    %155 = vmatpush1.msra.mxu0 0.0
    %156 = vmatprep.subr.mxu0 0.0
    %157 = vmatpush1.msra.mxu0 0.0
    %158 = vmatprep.subr.mxu0 0.0
    %159 = vmatpush1.msra.mxu0 0.0
    %160 = vmatprep.subr.mxu0 0.0
    %161 = vmatpush1.msra.mxu0 0.0
    %162 = vmatprep.subr.mxu0 0.0
    %163 = vmatpush1.msra.mxu0 0.0
    %164 = vmatprep.subr.mxu0 0.0
    %165 = vmatpush1.msra.mxu0 0.0
    %166 = vmatprep.subr.mxu0 0.0
    %167 = vmatpush1.msra.mxu0 0.0
    %168 = vmatprep.subr.mxu0 0.0
    %169 = vmatpush1.msra.mxu0 0.0
    %170 = vmatprep.subr.mxu0 0.0
    %171 = vmatpush1.msra.mxu0 0.0
    %172 = vmatprep.subr.mxu0 0.0
    %173 = vmatpush1.msra.mxu0 0.0
    %174 = vmatprep.subr.mxu0 0.0
    %175 = vmatpush1.msra.mxu0 0.0
    %176 = vmatprep.subr.mxu0 0.0
    %177 = vmatpush1.msra.mxu0 0.0
    %178 = vmatprep.subr.mxu0 0.0
    %179 = vmatpush1.msra.mxu0 0.0
    %180 = vmatprep.subr.mxu0 0.0
    %181 = vmatpush1.msra.mxu0 0.0
    %182 = vmatprep.subr.mxu0 0.0
    %183 = vmatpush1.msra.mxu0 0.0
    %184 = vmatprep.subr.mxu0 0.0
    %185 = vmatpush1.msra.mxu0 0.0
    %186 = vmatprep.subr.mxu0 0.0
    %187 = vmatpush1.msra.mxu0 0.0
    %188 = vmatprep.subr.mxu0 0.0
    %189 = vmatpush1.msra.mxu0 0.0
    %190 = vmatprep.subr.mxu0 0.0
    %191 = vmatpush1.msra.mxu0 0.0
    %192 = vmatprep.subr.mxu0 0.0
    %193 = vmatpush1.msra.mxu0 0.0
    %194 = vmatprep.subr.mxu0 0.0
    %195 = vmatpush1.msra.mxu0 0.0
    %196 = vmatprep.subr.mxu0 0.0
    %197 = vmatpush1.msra.mxu0 0.0
    %198 = vmatprep.subr.mxu0 0.0
    %199 = vmatpush1.msra.mxu0 0.0
    %200 = vmatprep.subr.mxu0 0.0
    %201 = vmatpush1.msra.mxu0 0.0
    %202 = vmatprep.subr.mxu0 0.0
    %203 = vmatpush1.msra.mxu0 0.0
    %204 = vmatprep.subr.mxu0 0.0
    %205 = vmatpush1.msra.mxu0 0.0
    %206 = vmatprep.subr.mxu0 0.0
    %207 = vmatpush1.msra.mxu0 0.0
    %208 = vmatprep.subr.mxu0 0.0
    %209 = vmatpush1.msra.mxu0 0.0
    %210 = vmatprep.subr.mxu0 0.0
    %211 = vmatpush1.msra.mxu0 0.0
    %212 = vmatprep.mubr.f32.mxu0 0.0
    %213 = vmatmul.mubr.f32.gmra.mrb[0].mxu0 %v75
    %v214 = vpop.f32.mrb[0].mxu0
    %v215 = vadd.f32 %v64, %v214
    %v216 = vpop.f32.mrb[0].mxu0
    %v217 = vadd.f32 %v68, %v216
    %218 = vdwg.mxu0
    %v219 = vmax.f32 %v144, 0.0
    %v220 = vmax.f32 %v146, 0.0
    %v221 = vmax.f32 %v215, 0.0
    %v222 = vmax.f32 %v217, 0.0
    %v223 = vld [vmem:[#allocation4] sm:$0xff]
    %v224 = vld [vmem:[#allocation4 + $0x8] sm:$0xff]
    %v225 = vld [vmem:[#allocation4 + $0x10] sm:$0xff]
    %v226 = vld [vmem:[#allocation4 + $0x18] sm:$0xff]
    %v227 = vld [vmem:[#allocation4 + $0x20] sm:$0xff]
    %v228 = vld [vmem:[#allocation4 + $0x28] sm:$0xff]
    %v229 = vld [vmem:[#allocation4 + $0x30] sm:$0xff]
    %v230 = vld [vmem:[#allocation4 + $0x38] sm:$0xff]
    %v231 = vld [vmem:[#allocation4 + $0x40] sm:$0xff]
    %v232 = vld [vmem:[#allocation4 + $0x48] sm:$0xff]
    %v233 = vld [vmem:[#allocation4 + $0x50] sm:$0xff]
    %v234 = vld [vmem:[#allocation4 + $0x58] sm:$0xff]
    %v235 = vld [vmem:[#allocation4 + $0x60] sm:$0xff]
    %v236 = vld [vmem:[#allocation4 + $0x68] sm:$0xff]
    %v237 = vld [vmem:[#allocation4 + $0x70] sm:$0xff]
    %v238 = vld [vmem:[#allocation4 + $0x78] sm:$0xff]
    %v239 = vld [vmem:[#allocation4 + $0x80] sm:$0xff]
    %v240 = vld [vmem:[#allocation4 + $0x88] sm:$0xff]
    %v241 = vld [vmem:[#allocation4 + $0x90] sm:$0xff]
    %v242 = vld [vmem:[#allocation4 + $0x98] sm:$0xff]
    %v243 = vld [vmem:[#allocation4 + $0xa0] sm:$0xff]
    %v244 = vld [vmem:[#allocation4 + $0xa8] sm:$0xff]
    %v245 = vld [vmem:[#allocation4 + $0xb0] sm:$0xff]
    %v246 = vld [vmem:[#allocation4 + $0xb8] sm:$0xff]
    %v247 = vld [vmem:[#allocation4 + $0xc0] sm:$0xff]
    %v248 = vld [vmem:[#allocation4 + $0xc8] sm:$0xff]
    %v249 = vld [vmem:[#allocation4 + $0xd0] sm:$0xff]
    %v250 = vld [vmem:[#allocation4 + $0xd8] sm:$0xff]
    %v251 = vld [vmem:[#allocation4 + $0xe0] sm:$0xff]
    %v252 = vld [vmem:[#allocation4 + $0xe8] sm:$0xff]
    %v253 = vld [vmem:[#allocation4 + $0xf0] sm:$0xff]
    %v254 = vld [vmem:[#allocation4 + $0xf8] sm:$0xff]
    %v255 = vld [vmem:[#allocation4 + $0x100] sm:$0xff]
    %v256 = vld [vmem:[#allocation4 + $0x108] sm:$0xff]
    %v257 = vld [vmem:[#allocation4 + $0x110] sm:$0xff]
    %v258 = vld [vmem:[#allocation4 + $0x118] sm:$0xff]
    %v259 = vld [vmem:[#allocation4 + $0x120] sm:$0xff]
    %v260 = vld [vmem:[#allocation4 + $0x128] sm:$0xff]
    %v261 = vld [vmem:[#allocation4 + $0x130] sm:$0xff]
    %v262 = vld [vmem:[#allocation4 + $0x138] sm:$0xff]
    %v263 = vld [vmem:[#allocation4 + $0x140] sm:$0xff]
    %v264 = vld [vmem:[#allocation4 + $0x148] sm:$0xff]
    %v265 = vld [vmem:[#allocation4 + $0x150] sm:$0xff]
    %v266 = vld [vmem:[#allocation4 + $0x158] sm:$0xff]
    %v267 = vld [vmem:[#allocation4 + $0x160] sm:$0xff]
    %v268 = vld [vmem:[#allocation4 + $0x168] sm:$0xff]
    %v269 = vld [vmem:[#allocation4 + $0x170] sm:$0xff]
    %v270 = vld [vmem:[#allocation4 + $0x178] sm:$0xff]
    %v271 = vld [vmem:[#allocation4 + $0x180] sm:$0xff]
    %v272 = vld [vmem:[#allocation4 + $0x188] sm:$0xff]
    %v273 = vld [vmem:[#allocation4 + $0x190] sm:$0xff]
    %v274 = vld [vmem:[#allocation4 + $0x198] sm:$0xff]
    %v275 = vld [vmem:[#allocation4 + $0x1a0] sm:$0xff]
    %v276 = vld [vmem:[#allocation4 + $0x1a8] sm:$0xff]
    %v277 = vld [vmem:[#allocation4 + $0x1b0] sm:$0xff]
    %v278 = vld [vmem:[#allocation4 + $0x1b8] sm:$0xff]
    %v279 = vld [vmem:[#allocation4 + $0x1c0] sm:$0xff]
    %v280 = vld [vmem:[#allocation4 + $0x1c8] sm:$0xff]
    %v281 = vld [vmem:[#allocation4 + $0x1d0] sm:$0xff]
    %v282 = vld [vmem:[#allocation4 + $0x1d8] sm:$0xff]
    %v283 = vld [vmem:[#allocation4 + $0x1e0] sm:$0xff]
    %v284 = vld [vmem:[#allocation4 + $0x1e8] sm:$0xff]
    %v285 = vld [vmem:[#allocation4 + $0x1f0] sm:$0xff]
    %v286 = vld [vmem:[#allocation4 + $0x1f8] sm:$0xff]
    %v287 = vld [vmem:[#allocation4 + $0x200] sm:$0xff]
    %v288 = vld [vmem:[#allocation4 + $0x208] sm:$0xff]
    %v289 = vld [vmem:[#allocation4 + $0x210] sm:$0xff]
    %v290 = vld [vmem:[#allocation4 + $0x218] sm:$0xff]
    %v291 = vld [vmem:[#allocation4 + $0x220] sm:$0xff]
    %v292 = vld [vmem:[#allocation4 + $0x228] sm:$0xff]
    %v293 = vld [vmem:[#allocation4 + $0x230] sm:$0xff]
    %v294 = vld [vmem:[#allocation4 + $0x238] sm:$0xff]
    %v295 = vld [vmem:[#allocation4 + $0x240] sm:$0xff]
    %v296 = vld [vmem:[#allocation4 + $0x248] sm:$0xff]
    %v297 = vld [vmem:[#allocation4 + $0x250] sm:$0xff]
    %v298 = vld [vmem:[#allocation4 + $0x258] sm:$0xff]
    %v299 = vld [vmem:[#allocation4 + $0x260] sm:$0xff]
    %v300 = vld [vmem:[#allocation4 + $0x268] sm:$0xff]
    %v301 = vld [vmem:[#allocation4 + $0x270] sm:$0xff]
    %v302 = vld [vmem:[#allocation4 + $0x278] sm:$0xff]
    %v303 = vld [vmem:[#allocation4 + $0x280] sm:$0xff]
    %v304 = vld [vmem:[#allocation4 + $0x288] sm:$0xff]
    %v305 = vld [vmem:[#allocation4 + $0x290] sm:$0xff]
    %v306 = vld [vmem:[#allocation4 + $0x298] sm:$0xff]
    %v307 = vld [vmem:[#allocation4 + $0x2a0] sm:$0xff]
    %v308 = vld [vmem:[#allocation4 + $0x2a8] sm:$0xff]
    %v309 = vld [vmem:[#allocation4 + $0x2b0] sm:$0xff]
    %v310 = vld [vmem:[#allocation4 + $0x2b8] sm:$0xff]
    %v311 = vld [vmem:[#allocation4 + $0x2c0] sm:$0xff]
    %v312 = vld [vmem:[#allocation4 + $0x2c8] sm:$0xff]
    %v313 = vld [vmem:[#allocation4 + $0x2d0] sm:$0xff]
    %v314 = vld [vmem:[#allocation4 + $0x2d8] sm:$0xff]
    %v315 = vld [vmem:[#allocation4 + $0x2e0] sm:$0xff]
    %v316 = vld [vmem:[#allocation4 + $0x2e8] sm:$0xff]
    %v317 = vld [vmem:[#allocation4 + $0x2f0] sm:$0xff]
    %v318 = vld [vmem:[#allocation4 + $0x2f8] sm:$0xff]
    %v319 = vld [vmem:[#allocation4 + $0x300] sm:$0xff]
    %v320 = vld [vmem:[#allocation4 + $0x308] sm:$0xff]
    %v321 = vld [vmem:[%s4] sm:$0x3]
    %v323 = vlaneseq
    %v324 = vshrl.u32 %v323, 7
    %v325 = vsub.s32 0, %v324
    %v326 = vrot.slane %v321, %v325
    %v327 = vlaneseq
    %v328 = vshrl.u32 %v327, 7
    %v329 = vsub.s32 1, %v328
    %v330 = vrot.slane %v321, %v329
    %v334 = vsel %vm73, %v222, 0
    %336 = vmatprep.subr.mxu0 %v224
    %337 = vmatpush1.msra.mxu0 %v223
    %338 = vmatprep.subr.mxu0 %v226
    %339 = vmatpush1.msra.mxu0 %v225
    %340 = vmatprep.subr.mxu0 %v228
    %341 = vmatpush1.msra.mxu0 %v227
    %342 = vmatprep.subr.mxu0 %v230
    %343 = vmatpush1.msra.mxu0 %v229
    %344 = vmatprep.subr.mxu0 %v232
    %345 = vmatpush1.msra.mxu0 %v231
    %346 = vmatprep.subr.mxu0 %v234
    %347 = vmatpush1.msra.mxu0 %v233
    %348 = vmatprep.subr.mxu0 %v236
    %349 = vmatpush1.msra.mxu0 %v235
    %350 = vmatprep.subr.mxu0 %v238
    %351 = vmatpush1.msra.mxu0 %v237
    %352 = vmatprep.subr.mxu0 %v240
    %353 = vmatpush1.msra.mxu0 %v239
    %354 = vmatprep.subr.mxu0 %v242
    %355 = vmatpush1.msra.mxu0 %v241
    %356 = vmatprep.subr.mxu0 %v244
    %357 = vmatpush1.msra.mxu0 %v243
    %358 = vmatprep.subr.mxu0 %v246
    %359 = vmatpush1.msra.mxu0 %v245
    %360 = vmatprep.subr.mxu0 %v248
    %361 = vmatpush1.msra.mxu0 %v247
    %362 = vmatprep.subr.mxu0 %v250
    %363 = vmatpush1.msra.mxu0 %v249
    %364 = vmatprep.subr.mxu0 %v252
    %365 = vmatpush1.msra.mxu0 %v251
    %366 = vmatprep.subr.mxu0 %v254
    %367 = vmatpush1.msra.mxu0 %v253
    %368 = vmatprep.subr.mxu0 %v256
    %369 = vmatpush1.msra.mxu0 %v255
    %370 = vmatprep.subr.mxu0 %v258
    %371 = vmatpush1.msra.mxu0 %v257
    %372 = vmatprep.subr.mxu0 %v260
    %373 = vmatpush1.msra.mxu0 %v259
    %374 = vmatprep.subr.mxu0 %v262
    %375 = vmatpush1.msra.mxu0 %v261
    %376 = vmatprep.subr.mxu0 %v264
    %377 = vmatpush1.msra.mxu0 %v263
    %378 = vmatprep.subr.mxu0 %v266
    %379 = vmatpush1.msra.mxu0 %v265
    %380 = vmatprep.subr.mxu0 %v268
    %381 = vmatpush1.msra.mxu0 %v267
    %382 = vmatprep.subr.mxu0 %v270
    %383 = vmatpush1.msra.mxu0 %v269
    %384 = vmatprep.subr.mxu0 %v272
    %385 = vmatpush1.msra.mxu0 %v271
    %386 = vmatprep.subr.mxu0 %v274
    %387 = vmatpush1.msra.mxu0 %v273
    %388 = vmatprep.subr.mxu0 %v276
    %389 = vmatpush1.msra.mxu0 %v275
    %390 = vmatprep.subr.mxu0 %v278
    %391 = vmatpush1.msra.mxu0 %v277
    %392 = vmatprep.subr.mxu0 %v280
    %393 = vmatpush1.msra.mxu0 %v279
    %394 = vmatprep.subr.mxu0 %v282
    %395 = vmatpush1.msra.mxu0 %v281
    %396 = vmatprep.subr.mxu0 %v284
    %397 = vmatpush1.msra.mxu0 %v283
    %398 = vmatprep.subr.mxu0 %v286
    %399 = vmatpush1.msra.mxu0 %v285
    %400 = vmatprep.mubr.f32.mxu0 %v220
    %401 = vmatmul.mubr.f32.gmra.mrb[0].mxu0 %v219
    %v402 = vpop.f32.mrb[0].mxu0
    %v403 = vadd.f32 %v326, %v402
    %v404 = vpop.f32.mrb[0].mxu0
    %v405 = vadd.f32 %v330, %v404
    %406 = vdwg.mxu0
    %407 = vmatprep.subr.mxu0 %v288
    %408 = vmatpush1.msra.mxu0 %v287
    %409 = vmatprep.subr.mxu0 %v290
    %410 = vmatpush1.msra.mxu0 %v289
    %411 = vmatprep.subr.mxu0 %v292
    %412 = vmatpush1.msra.mxu0 %v291
    %413 = vmatprep.subr.mxu0 %v294
    %414 = vmatpush1.msra.mxu0 %v293
    %415 = vmatprep.subr.mxu0 %v296
    %416 = vmatpush1.msra.mxu0 %v295
    %417 = vmatprep.subr.mxu0 %v298
    %418 = vmatpush1.msra.mxu0 %v297
    %419 = vmatprep.subr.mxu0 %v300
    %420 = vmatpush1.msra.mxu0 %v299
    %421 = vmatprep.subr.mxu0 %v302
    %422 = vmatpush1.msra.mxu0 %v301
    %423 = vmatprep.subr.mxu0 %v304
    %424 = vmatpush1.msra.mxu0 %v303
    %425 = vmatprep.subr.mxu0 %v306
    %426 = vmatpush1.msra.mxu0 %v305
    %427 = vmatprep.subr.mxu0 %v308
    %428 = vmatpush1.msra.mxu0 %v307
    %429 = vmatprep.subr.mxu0 %v310
    %430 = vmatpush1.msra.mxu0 %v309
    %431 = vmatprep.subr.mxu0 %v312
    %432 = vmatpush1.msra.mxu0 %v311
    %433 = vmatprep.subr.mxu0 %v314
    %434 = vmatpush1.msra.mxu0 %v313
    %435 = vmatprep.subr.mxu0 %v316
    %436 = vmatpush1.msra.mxu0 %v315
    %437 = vmatprep.subr.mxu0 %v318
    %438 = vmatpush1.msra.mxu0 %v317
    %439 = vmatprep.subr.mxu0 %v320
    %440 = vmatpush1.msra.mxu0 %v319
    %441 = vmatprep.subr.mxu0 0.0
    %442 = vmatpush1.msra.mxu0 0.0
    %443 = vmatprep.subr.mxu0 0.0
    %444 = vmatpush1.msra.mxu0 0.0
    %445 = vmatprep.subr.mxu0 0.0
    %446 = vmatpush1.msra.mxu0 0.0
    %447 = vmatprep.subr.mxu0 0.0
    %448 = vmatpush1.msra.mxu0 0.0
    %449 = vmatprep.subr.mxu0 0.0
    %450 = vmatpush1.msra.mxu0 0.0
    %451 = vmatprep.subr.mxu0 0.0
    %452 = vmatpush1.msra.mxu0 0.0
    %453 = vmatprep.subr.mxu0 0.0
    %454 = vmatpush1.msra.mxu0 0.0
    %455 = vmatprep.subr.mxu0 0.0
    %456 = vmatpush1.msra.mxu0 0.0
    %457 = vmatprep.subr.mxu0 0.0
    %458 = vmatpush1.msra.mxu0 0.0
    %459 = vmatprep.subr.mxu0 0.0
    %460 = vmatpush1.msra.mxu0 0.0
    %461 = vmatprep.subr.mxu0 0.0
    %462 = vmatpush1.msra.mxu0 0.0
    %463 = vmatprep.subr.mxu0 0.0
    %464 = vmatpush1.msra.mxu0 0.0
    %465 = vmatprep.subr.mxu0 0.0
    %466 = vmatpush1.msra.mxu0 0.0
    %467 = vmatprep.subr.mxu0 0.0
    %468 = vmatpush1.msra.mxu0 0.0
    %469 = vmatprep.subr.mxu0 0.0
    %470 = vmatpush1.msra.mxu0 0.0
    %471 = vmatprep.mubr.f32.mxu0 %v334
    %472 = vmatmul.mubr.f32.gmra.mrb[0].mxu0 %v221
    %v473 = vpop.f32.mrb[0].mxu0
    %v474 = vadd.f32 %v403, %v473
    %v475 = vpop.f32.mrb[0].mxu0
    %v476 = vadd.f32 %v405, %v475
    %477 = vdwg.mxu0
    %v478 = vand.u32 2147483647, %v474
    %v479 = vand.u32 2147483647, %v476
    %v480 = vsub.f32 0.0, %v478
    %v481 = vsub.f32 0.0, %v479
    %v482 = vmul.f32 %v480, 1.442695
    %v483 = vpow.pop %v482
    %v484 = vmul.f32 %v481, 1.442695
    %v485 = vpow.pop %v484
    %vm486 = vcmp.ge.f32.partialorder %v474, 0.0
    %vm487 = vcmp.ge.f32.partialorder %v476, 0.0
    %v488 = vadd.f32 %v483, 1.0
    %v489 = vadd.f32 %v485, 1.0
    %v490 = vrcp.pop %v488
    %v491 = vmul.f32 1.0, %v490
    %v492 = vrcp.pop %v489
    %v493 = vmul.f32 1.0, %v492
    %v494 = vmul.f32 %v483, %v490
    %v495 = vmul.f32 %v485, %v492
    %v496 = vsel %vm486, %v491, %v494
    %v497 = vsel %vm487, %v493, %v495
    %498 = vst [vmem:[%s5] sm:$0xff] %v496
    %499 = vst [vmem:[%s5 + $0x8] sm:$0xff] %v497
    // Predicated region
    $region30: #{_decoder_jit.1} parent=1 // pred_check
      _
    $region31: #{_decoder_jit.1} parent=1 // pred_check_branch
      %501 = sbr.rel (0) target = $region33
    $region32: #{_decoder_jit.1} parent=1 // pred_region
      _
    $region33: #{_decoder_jit.1} parent=1 // pred_fallthru
      _
    // Predicated region
    $region34: #{_decoder_jit.1} parent=1 // pred_check
      _
    $region35: #{_decoder_jit.1} parent=1 // pred_check_branch
      %503 = sbr.rel (0) target = $region37
    $region36: #{_decoder_jit.1} parent=1 // pred_region
      _
    $region37: #{_decoder_jit.1} parent=1 // pred_fallthru
      _
    %504 = vsyncpa [#allocation3], 1
    %505 = vsyncpa [#allocation5], 1

</llo_original>
